<compile_context>
chip_gen: v7x
topology: tpu7x:2x2x1
jax: 0.10.0
libtpu: 0.0.40
codegen_flags: <defaults>
</compile_context>

<pallas_src>
import functools

import jax
import jax.numpy as jnp
from jax.experimental import pallas as pl
from jax.experimental.pallas import tpu as pltpu

_EPS = 1e-6


# ----------------------------------------------------------------------------
# Kernels
# ----------------------------------------------------------------------------
def _ln_res_kernel(x_ref, out_ref, a_ref, b_ref, y_ref, *, feat):
    """Standard path: one original row per block row (feat on lanes)."""
    o = out_ref[...].astype(jnp.float32)          # (tr, feat)
    a = a_ref[...].astype(jnp.float32)            # (1, feat), resident
    b = b_ref[...].astype(jnp.float32)            # (1, feat)

    # One-pass statistics: both reductions can interleave on the XLU.
    s = jnp.sum(o, axis=-1, keepdims=True)                        # (tr, 1)
    sq = jnp.sum(o * o, axis=-1, keepdims=True)                   # (tr, 1)
    mean = s * (1.0 / feat)
    var = (sq - mean * s) * (1.0 / max(feat - 1, 1))              # unbiased (ddof=1)
    std = jnp.sqrt(jnp.maximum(var, 0.0))
    inv = 1.0 / (std + _EPS)                                      # exact; EUP is idle
    normed = (o - mean) * inv * a + b
    # Residual add in f32, single cast to the output dtype.
    y_ref[...] = (x_ref[...].astype(jnp.float32) + normed).astype(y_ref.dtype)


def _ln_res_packed_kernel(x_ref, out_ref, a_ref, b_ref, seg_ref, y_ref, *, feat):
    """Lane-dense path: p = 128 // feat original rows packed per 128-lane row.

    seg_ref is a (128, 128) block-diagonal 0/1 matrix; o @ seg yields each
    segment's sum broadcast to every lane of that segment (single MXU op).
    """
    o = out_ref[...].astype(jnp.float32)          # (tr, 128)
    a = a_ref[...].astype(jnp.float32)            # (1, 128) = a_2 tiled p times
    b = b_ref[...].astype(jnp.float32)            # (1, 128)
    seg = seg_ref[...]                            # (128, 128) f32, resident

    s = jnp.dot(o, seg, preferred_element_type=jnp.float32)       # segment sums
    sq = jnp.dot(o * o, seg, preferred_element_type=jnp.float32)  # segment sumsq
    mean = s * (1.0 / feat)
    var = (sq - mean * s) * (1.0 / max(feat - 1, 1))
    std = jnp.sqrt(jnp.maximum(var, 0.0))
    inv = 1.0 / (std + _EPS)
    normed = (o - mean) * inv * a + b
    y_ref[...] = (x_ref[...].astype(jnp.float32) + normed).astype(y_ref.dtype)


# ----------------------------------------------------------------------------
# Tiling helpers
# ----------------------------------------------------------------------------
def _round_up(n, m):
    return ((n + m - 1) // m) * m


def _vmem_capacity_bytes():
    try:
        info = pltpu.get_tpu_info()
        cap = int(getattr(info, "vmem_capacity_bytes", 0))
        if cap > 0:
            return cap
    except Exception:
        pass
    return 64 * 1024 * 1024  # conservative: v7x per-TensorCore physical VMEM


def _choose_row_tile(nrows, lanes, io_itemsize, sublane, vmem_cap):
    """Row tile that (a) targets multi-MiB streamed blocks, (b) accounts for the
    ~4x f32 temporaries the kernel materializes on top of the double-buffered
    IO blocks, (c) on small-VMEM (v7x, 2 TC) parts keeps >= 4 grid steps so
    each TensorCore gets >= 2 blocks, (d) is sublane-packing aligned."""
    if nrows <= sublane:
        return max(nrows, 1)
    per_row_block = lanes * io_itemsize
    per_row_vmem = lanes * (6 * io_itemsize + 4 * 4)   # 3 streams x 2 bufs + f32 temps
    big_vmem = vmem_cap >= 100 * 1024 * 1024            # 128 MiB parts (v5e / v6e)
    target_block = (8 if big_vmem else 4) * 1024 * 1024
    budget = int(vmem_cap * 0.6)

    tile = max(sublane, target_block // per_row_block)
    tile = min(tile, max(sublane, budget // per_row_vmem))
    rows_al = _round_up(nrows, sublane)
    tile = min(tile, rows_al)
    if (not big_vmem) and rows_al >= 4 * sublane:
        # v7x megacore: >= 4 steps total -> >= 2 per TensorCore (pipelining).
        tile = min(tile, max(sublane, (rows_al // 4) // sublane * sublane))
    return max(sublane, (tile // sublane) * sublane)


# ----------------------------------------------------------------------------
# Wrapper
# ----------------------------------------------------------------------------
def res_connect(x, out, a_2, b_2, *, row_tile=None):
    """x, out: (..., F); a_2, b_2: (F,). Returns x + layernorm(dropout(out))."""
    orig_shape = x.shape
    feat = int(orig_shape[-1])
    rows = 1
    for d in orig_shape[:-1]:
        rows *= int(d)

    out_dtype = x.dtype
    io_itemsize = max(jnp.dtype(x.dtype).itemsize, jnp.dtype(out.dtype).itemsize)
    sublane = max(8, 32 // io_itemsize)        # 8 f32 / 16 bf16 / 32 int8-fp8
    vmem_cap = _vmem_capacity_bytes()

    x2 = x.reshape(rows, feat)
    o2 = out.reshape(rows, feat)

    # Lane-dense packing: feat < 128, 128 % feat == 0, rows divisible by p.
    packed = (feat < 128) and (128 % feat == 0) and (rows % (128 // feat) == 0)
    if packed:
        p = 128 // feat
        nrows = rows // p
        lanes = 128
        x2 = x2.reshape(nrows, lanes)          # free contiguous reshape (no copy)
        o2 = o2.reshape(nrows, lanes)
        a_in = jnp.tile(a_2.reshape(1, feat), (1, p)).astype(a_2.dtype)
        b_in = jnp.tile(b_2.reshape(1, feat), (1, p)).astype(b_2.dtype)
        row_seg = jax.lax.broadcasted_iota(jnp.int32, (lanes, lanes), 0) // feat
        col_seg = jax.lax.broadcasted_iota(jnp.int32, (lanes, lanes), 1) // feat
        seg = (row_seg == col_seg).astype(jnp.float32)
    else:
        nrows = rows
        lanes = feat
        a_in = a_2.reshape(1, feat)
        b_in = b_2.reshape(1, feat)
        seg = None

    if row_tile is None:
        row_tile = _choose_row_tile(nrows, lanes, io_itemsize, sublane, vmem_cap)
    else:
        row_tile = max(1, int(row_tile))
        if row_tile < nrows:                   # keep sublane alignment if tiling
            row_tile = max(sublane, (row_tile // sublane) * sublane)
    if row_tile >= nrows:
        row_tile = nrows                       # single full-extent block (always legal)

    # No padding / slicing: ragged last block, OOB writes are dropped.
    grid = (pl.cdiv(nrows, row_tile),)

    # VMEM limit: double-buffered IO blocks + ~4x f32 temporaries + residents.
    block_io = row_tile * lanes * io_itemsize
    block_f32 = row_tile * lanes * 4
    resident = (lanes * lanes * 4 if packed else 0) + 4 * lanes * 4
    footprint = 6 * block_io + 4 * block_f32 + resident
    vmem_limit = max(32 * 1024 * 1024, footprint + footprint // 2 + (2 << 20))
    vmem_limit = int(min(vmem_limit, int(vmem_cap * 0.95)))

    compiler_params = pltpu.CompilerParams(
        dimension_semantics=("parallel",),
        vmem_limit_bytes=vmem_limit,
    )

    if packed:
        kernel = functools.partial(_ln_res_packed_kernel, feat=feat)
        in_specs = [
            pl.BlockSpec((row_tile, lanes), lambda i: (i, 0)),   # x
            pl.BlockSpec((row_tile, lanes), lambda i: (i, 0)),   # out
            pl.BlockSpec((1, lanes), lambda i: (0, 0)),          # a (resident)
            pl.BlockSpec((1, lanes), lambda i: (0, 0)),          # b (resident)
            pl.BlockSpec((lanes, lanes), lambda i: (0, 0)),      # seg matrix (resident)
        ]
        args = (x2, o2, a_in, b_in, seg)
    else:
        kernel = functools.partial(_ln_res_kernel, feat=feat)
        in_specs = [
            pl.BlockSpec((row_tile, lanes), lambda i: (i, 0)),   # x
            pl.BlockSpec((row_tile, lanes), lambda i: (i, 0)),   # out
            pl.BlockSpec((1, lanes), lambda i: (0, 0)),          # a (resident)
            pl.BlockSpec((1, lanes), lambda i: (0, 0)),          # b (resident)
        ]
        args = (x2, o2, a_in, b_in)

    y2 = pl.pallas_call(
        kernel,
        out_shape=jax.ShapeDtypeStruct((nrows, lanes), out_dtype),
        grid_spec=pltpu.PrefetchScalarGridSpec(
            num_scalar_prefetch=0,
            grid=grid,
            in_specs=in_specs,
            out_specs=pl.BlockSpec((row_tile, lanes), lambda i: (i, 0)),
        ),
        compiler_params=compiler_params,
    )(*args)

    return y2.reshape(orig_shape)


# ----------------------------------------------------------------------------
# Demo / self-check
# ----------------------------------------------------------------------------
if __name__ == "__main__":
    def ref_fn(x, out, a, b, feat):
        mean = jnp.mean(out, axis=-1, keepdims=True)
        std = jnp.sqrt(jnp.sum((out - mean) ** 2, axis=-1, keepdims=True)
                       / max(feat - 1, 1))
        return x + a * (out - mean) / (std + _EPS) + b

    # --- main case: batch=2, seq=8, hidden(size)=32  -> lane-dense packed path
    batch, seq, size = 2, 8, 32
    key = jax.random.PRNGKey(0)
    kx, ko = jax.random.split(key)
    x = jax.random.normal(kx, (batch, seq, size), dtype=jnp.float32)
    out = jax.random.normal(ko, (batch, seq, size), dtype=jnp.float32)
    a_2 = jnp.ones((size,), dtype=jnp.float32)   # nn.Parameter(torch.ones(size))
    b_2 = jnp.zeros((size,), dtype=jnp.float32)  # nn.Parameter(torch.zeros(size))

    y = jax.block_until_ready(res_connect(x, out, a_2, b_2))
    ref = ref_fn(x, out, a_2, b_2, size)
    assert jnp.allclose(y, ref, atol=1e-4, rtol=1e-4), "packed-path mismatch"

    # --- secondary case: feat >= 128 standard path with a ragged last block
    b2_, s2_, f2_ = 3, 7, 256   # rows=21, row_tile=8 -> grid=3, last block ragged
    k1, k2 = jax.random.split(ko)
    xs = jax.random.normal(k1, (b2_, s2_, f2_), dtype=jnp.float32)
    os_ = jax.random.normal(k2, (b2_, s2_, f2_), dtype=jnp.float32)
    a_s = 1.0 + 0.1 * jnp.arange(f2_, dtype=jnp.float32) / f2_
    b_s = 0.01 * jnp.arange(f2_, dtype=jnp.float32) / f2_
    ys = jax.block_until_ready(res_connect(xs, os_, a_s, b_s, row_tile=8))
    refs = ref_fn(xs, os_, a_s, b_s, f2_)
    assert jnp.allclose(ys, refs, atol=1e-4, rtol=1e-4), "standard-path mismatch"

    print("KERNEL_OK")
</pallas_src>

<mosaic_0001>
module attributes {stable_mosaic.version = 11 : i64} {
  func.func @_ln_res_packed_kernel(%arg0: i32, %arg1: memref<4x128xf32, #tpu.memory_space<vmem>>, %arg2: memref<4x128xf32, #tpu.memory_space<vmem>>, %arg3: memref<1x128xf32, #tpu.memory_space<vmem>>, %arg4: memref<1x128xf32, #tpu.memory_space<vmem>>, %arg5: memref<128x128xf32, #tpu.memory_space<vmem>>, %arg6: memref<4x128xf32, #tpu.memory_space<vmem>>) attributes {dimension_semantics = [#tpu.dimension_semantics<parallel>], iteration_bounds = array<i64: 1>, scalar_prefetch = 0 : i64, scratch_operands = 0 : i64, tpu.core_type = #tpu.core_type<tc>, window_params = [{transform_indices = @transform_0, window_bounds = array<i64: 4, 128>}, {transform_indices = @transform_1, window_bounds = array<i64: 4, 128>}, {pipeline_mode = #tpu.pipeline_mode<synchronous>, transform_indices = @transform_2, window_bounds = array<i64: 1, 128>}, {pipeline_mode = #tpu.pipeline_mode<synchronous>, transform_indices = @transform_3, window_bounds = array<i64: 1, 128>}, {pipeline_mode = #tpu.pipeline_mode<synchronous>, transform_indices = @transform_4, window_bounds = array<i64: 128, 128>}, {transform_indices = @transform_5, window_bounds = array<i64: 4, 128>}]} {
    %c0 = arith.constant 0 : index
    %c0_0 = arith.constant 0 : index
    %0 = vector.load %arg2[%c0, %c0_0] : memref<4x128xf32, #tpu.memory_space<vmem>>, vector<4x128xf32>
    %c0_1 = arith.constant 0 : index
    %c0_2 = arith.constant 0 : index
    %1 = vector.load %arg3[%c0_1, %c0_2] : memref<1x128xf32, #tpu.memory_space<vmem>>, vector<1x128xf32>
    %c0_3 = arith.constant 0 : index
    %c0_4 = arith.constant 0 : index
    %2 = vector.load %arg4[%c0_3, %c0_4] : memref<1x128xf32, #tpu.memory_space<vmem>>, vector<1x128xf32>
    %c0_5 = arith.constant 0 : index
    %c0_6 = arith.constant 0 : index
    %3 = vector.load %arg5[%c0_5, %c0_6] : memref<128x128xf32, #tpu.memory_space<vmem>>, vector<128x128xf32>
    %cst = arith.constant dense<0.000000e+00> : vector<4x128xf32>
    %4 = tpu.matmul %0, %3, %cst {dimension_numbers = #tpu.dot_dimension_numbers<[1], [0], [0], [1], [0, 0, 1, 1], [], []>} : vector<4x128xf32>, vector<128x128xf32>, vector<4x128xf32> -> vector<4x128xf32>
    %5 = arith.mulf %0, %0 : vector<4x128xf32>
    %cst_7 = arith.constant dense<0.000000e+00> : vector<4x128xf32>
    %6 = tpu.matmul %5, %3, %cst_7 {dimension_numbers = #tpu.dot_dimension_numbers<[1], [0], [0], [1], [0, 0, 1, 1], [], []>} : vector<4x128xf32>, vector<128x128xf32>, vector<4x128xf32> -> vector<4x128xf32>
    %cst_8 = arith.constant 3.125000e-02 : f32
    %7 = vector.broadcast %cst_8 : f32 to vector<4x128xf32>
    %8 = arith.mulf %4, %7 : vector<4x128xf32>
    %9 = arith.mulf %8, %4 : vector<4x128xf32>
    %10 = arith.subf %6, %9 : vector<4x128xf32>
    %cst_9 = arith.constant 0.0322580636 : f32
    %11 = vector.broadcast %cst_9 : f32 to vector<4x128xf32>
    %12 = arith.mulf %10, %11 : vector<4x128xf32>
    %cst_10 = arith.constant 0.000000e+00 : f32
    %13 = vector.broadcast %cst_10 : f32 to vector<4x128xf32>
    %14 = arith.maximumf %12, %13 : vector<4x128xf32>
    %15 = math.sqrt %14 : vector<4x128xf32>
    %cst_11 = arith.constant 9.99999997E-7 : f32
    %16 = vector.broadcast %cst_11 : f32 to vector<4x128xf32>
    %17 = arith.addf %15, %16 : vector<4x128xf32>
    %cst_12 = arith.constant 1.000000e+00 : f32
    %18 = vector.broadcast %cst_12 : f32 to vector<4x128xf32>
    %19 = arith.divf %18, %17 : vector<4x128xf32>
    %20 = arith.subf %0, %8 : vector<4x128xf32>
    %21 = arith.mulf %20, %19 : vector<4x128xf32>
    %22 = vector.broadcast %1 : vector<1x128xf32> to vector<4x128xf32>
    %23 = arith.mulf %21, %22 : vector<4x128xf32>
    %24 = vector.broadcast %2 : vector<1x128xf32> to vector<4x128xf32>
    %25 = arith.addf %23, %24 : vector<4x128xf32>
    %c0_13 = arith.constant 0 : index
    %c0_14 = arith.constant 0 : index
    %26 = vector.load %arg1[%c0_13, %c0_14] : memref<4x128xf32, #tpu.memory_space<vmem>>, vector<4x128xf32>
    %27 = arith.addf %26, %25 : vector<4x128xf32>
    %c0_15 = arith.constant 0 : index
    %c0_16 = arith.constant 0 : index
    %28 = vector.load %arg6[%c0_15, %c0_16] : memref<4x128xf32, #tpu.memory_space<vmem>>, vector<4x128xf32>
    tpu.vector_store %arg6[%c0_15, %c0_16], %27 {strides = array<i32>} : memref<4x128xf32, #tpu.memory_space<vmem>>, vector<4x128xf32>,
    return
  }
  func.func @transform_0(%arg0: i32) -> (i32, i32) {
    %c0_i32 = arith.constant 0 : i32
    %c0_i32_0 = arith.constant 0 : i32
    return %arg0, %c0_i32 : i32, i32
  }
  func.func @transform_1(%arg0: i32) -> (i32, i32) {
    %c0_i32 = arith.constant 0 : i32
    %c0_i32_0 = arith.constant 0 : i32
    return %arg0, %c0_i32 : i32, i32
  }
  func.func @transform_2(%arg0: i32) -> (i32, i32) {
    %c0_i32 = arith.constant 0 : i32
    %c0_i32_0 = arith.constant 0 : i32
    %c0_i32_1 = arith.constant 0 : i32
    return %c0_i32, %c0_i32_0 : i32, i32
  }
  func.func @transform_3(%arg0: i32) -> (i32, i32) {
    %c0_i32 = arith.constant 0 : i32
    %c0_i32_0 = arith.constant 0 : i32
    %c0_i32_1 = arith.constant 0 : i32
    return %c0_i32, %c0_i32_0 : i32, i32
  }
  func.func @transform_4(%arg0: i32) -> (i32, i32) {
    %c0_i32 = arith.constant 0 : i32
    %c0_i32_0 = arith.constant 0 : i32
    %c0_i32_1 = arith.constant 0 : i32
    return %c0_i32, %c0_i32_0 : i32, i32
  }
  func.func @transform_5(%arg0: i32) -> (i32, i32) {
    %c0_i32 = arith.constant 0 : i32
    %c0_i32_0 = arith.constant 0 : i32
    return %arg0, %c0_i32 : i32, i32
  }
}

</mosaic_0001>

<llo_original>
// kernel: tpu_custom_call.1
$region0: #{tpu_custom_call.1}
  #allocation0 [shape = 'u32[]', space=smem, size = 0x4, offset = 0x4, fixed_abs, tag = 'smem constant byte address 0x4 - core index']
  #allocation1 [shape = 'u32[144,128]{1,0:T(1,128)}', space=vmem, size = 0x12000, scoped, tag = 'internal scratch']
  %s0 = inlined_call_operand.hbm [shape: f32[4,128], index: 0, kind: input, shape index: {}]
  %s1 = inlined_call_operand.hbm [shape: f32[4,128], index: 1, kind: input, shape index: {}]
  %s2 = inlined_call_operand.vmem [shape: f32[1,128], index: 2, kind: input, shape index: {}]
  %s3 = inlined_call_operand.vmem [shape: f32[1,128], index: 3, kind: input, shape index: {}]
  %s4 = inlined_call_operand.hbm [shape: f32[128,128], index: 4, kind: input, shape index: {}]
  %s5 = inlined_call_operand.hbm [shape: f32[4,128], index: 5, kind: output, shape index: {}]
  %s6 = sld [smem:[#allocation0]]
  $region42: #{tpu_custom_call.1} parent=0
    _
  %s8 = ssub.s32 1, %s6
  %s9 = scalar_select 0, %s8, %s6
  $region1: #{tpu_custom_call.1} parent=0
    #allocation2 [shape = 'u8[2048]{0}', space=vmem, size = 0x800, scoped, tag = 'input window, operand 0, single buffered']
    #allocation3 [shape = 's32[1]{0}', space=sflag, size = 0x4, scoped, tag = 'scoped memory for tpu_custom_call.1']
    #allocation4 [shape = 's32[1]{0}', space=sflag, size = 0x4, scoped, tag = 'scoped memory for tpu_custom_call.1']
    #allocation5 [shape = 'u8[2048]{0}', space=vmem, size = 0x800, scoped, tag = 'input window, operand 1, single buffered']
    #allocation6 [shape = 's32[1]{0}', space=sflag, size = 0x4, scoped, tag = 'scoped memory for tpu_custom_call.1']
    #allocation7 [shape = 'u8[65536]{0}', space=vmem, size = 0x10000, scoped, tag = 'input window, operand 4, single buffered']
    #allocation8 [shape = 'u8[2048]{0}', space=vmem, size = 0x800, scoped, tag = 'output window, operand 0, single buffered']
    %10 = vsyncpa [#allocation3], 0
    %11 = vsyncpa [#allocation6], 0
    %12 = vsyncpa [#allocation4], 0
    // Predicated region
    $region2: #{tpu_custom_call.1} parent=1 // pred_check
      _
    $region3: #{tpu_custom_call.1} parent=1 // pred_check_branch
      %14 = sbr.rel (0) target = $region5
    $region4: #{tpu_custom_call.1} parent=1 // pred_region
      %s16 = ssub.s32 64, 64
      %17 = vsyncadd [#allocation3], %s16
      %s19 = sshll.u32 [#allocation2], 4
      %s20 = int_to_ptr.vmem [resolvable:$true] %s19
      %22 = dma.hbm_to_vmem [thread:$0]  %s0, 64, %s20, [#allocation3]
    $region5: #{tpu_custom_call.1} parent=1 // pred_fallthru
      _
    // Predicated region
    $region6: #{tpu_custom_call.1} parent=1 // pred_check
      _
    $region7: #{tpu_custom_call.1} parent=1 // pred_check_branch
      %24 = sbr.rel (0) target = $region9
    $region8: #{tpu_custom_call.1} parent=1 // pred_region
      %s26 = ssub.s32 64, 64
      %27 = vsyncadd [#allocation6], %s26
      %s29 = sshll.u32 [#allocation5], 4
      %s30 = int_to_ptr.vmem [resolvable:$true] %s29
      %32 = dma.hbm_to_vmem [thread:$0]  %s1, 64, %s30, [#allocation6]
    $region9: #{tpu_custom_call.1} parent=1 // pred_fallthru
      _
    // Predicated region
    $region10: #{tpu_custom_call.1} parent=1 // pred_check
      _
    $region11: #{tpu_custom_call.1} parent=1 // pred_check_branch
      %34 = sbr.rel (0) target = $region13
    $region12: #{tpu_custom_call.1} parent=1 // pred_region
      _
    $region13: #{tpu_custom_call.1} parent=1 // pred_fallthru
      _
    // Predicated region
    $region14: #{tpu_custom_call.1} parent=1 // pred_check
      _
    $region15: #{tpu_custom_call.1} parent=1 // pred_check_branch
      %36 = sbr.rel (0) target = $region17
    $region16: #{tpu_custom_call.1} parent=1 // pred_region
      _
    $region17: #{tpu_custom_call.1} parent=1 // pred_fallthru
      _
    // Predicated region
    $region18: #{tpu_custom_call.1} parent=1 // pred_check
      _
    $region19: #{tpu_custom_call.1} parent=1 // pred_check_branch
      %38 = sbr.rel (0) target = $region21
    $region20: #{tpu_custom_call.1} parent=1 // pred_region
      %s40 = ssub.s32 2048, 2048
      %41 = vsyncadd [#allocation6], %s40
      %s42 = sshll.u32 [#allocation7], 4
      %s43 = int_to_ptr.vmem [resolvable:$true] %s42
      %48 = dma.hbm_to_vmem [thread:$0]  %s4, 2048, %s43, [#allocation6], 128, 128, 8
    $region21: #{tpu_custom_call.1} parent=1 // pred_fallthru
      _
    // Predicated region
    $region22: #{tpu_custom_call.1} parent=1 // pred_check
      _
    $region23: #{tpu_custom_call.1} parent=1 // pred_check_branch
      %50 = sbr.rel (0) target = $region25
    $region24: #{tpu_custom_call.1} parent=1 // pred_region
      %51 = dma.done [#allocation3], 64
    $region25: #{tpu_custom_call.1} parent=1 // pred_fallthru
      _
    // Predicated region
    $region26: #{tpu_custom_call.1} parent=1 // pred_check
      _
    $region27: #{tpu_custom_call.1} parent=1 // pred_check_branch
      %53 = sbr.rel (0) target = $region29
    $region28: #{tpu_custom_call.1} parent=1 // pred_region
      %54 = dma.done [#allocation6], 64
    $region29: #{tpu_custom_call.1} parent=1 // pred_fallthru
      _
    // Predicated region
    $region30: #{tpu_custom_call.1} parent=1 // pred_check
      _
    $region31: #{tpu_custom_call.1} parent=1 // pred_check_branch
      %56 = sbr.rel (0) target = $region33
    $region32: #{tpu_custom_call.1} parent=1 // pred_region
      %57 = dma.done [#allocation6], 2048
    $region33: #{tpu_custom_call.1} parent=1 // pred_fallthru
      _
    %v58 = vld [vmem:[#allocation5] sm:$0xf]
    %v59 = vld [vmem:[%s2] sm:$0x1]
    %v60 = vld [vmem:[%s3] sm:$0x1]
    %v61 = vld [vmem:[#allocation7] sm:$0xff]
    %v62 = vld [vmem:[#allocation7 + $0x8] sm:$0xff]
    %v63 = vld [vmem:[#allocation7 + $0x10] sm:$0xff]
    %v64 = vld [vmem:[#allocation7 + $0x18] sm:$0xff]
    %v65 = vld [vmem:[#allocation7 + $0x20] sm:$0xff]
    %v66 = vld [vmem:[#allocation7 + $0x28] sm:$0xff]
    %v67 = vld [vmem:[#allocation7 + $0x30] sm:$0xff]
    %v68 = vld [vmem:[#allocation7 + $0x38] sm:$0xff]
    %v69 = vld [vmem:[#allocation7 + $0x40] sm:$0xff]
    %v70 = vld [vmem:[#allocation7 + $0x48] sm:$0xff]
    %v71 = vld [vmem:[#allocation7 + $0x50] sm:$0xff]
    %v72 = vld [vmem:[#allocation7 + $0x58] sm:$0xff]
    %v73 = vld [vmem:[#allocation7 + $0x60] sm:$0xff]
    %v74 = vld [vmem:[#allocation7 + $0x68] sm:$0xff]
    %v75 = vld [vmem:[#allocation7 + $0x70] sm:$0xff]
    %v76 = vld [vmem:[#allocation7 + $0x78] sm:$0xff]
    %77 = vmatprep.subr.mxu0 0.0
    %78 = vmatpush1.msra.mxu0 %v61
    %79 = vmatprep.subr.mxu0 0.0
    %80 = vmatpush1.msra.mxu0 %v62
    %81 = vmatprep.subr.mxu0 0.0
    %82 = vmatpush1.msra.mxu0 %v63
    %83 = vmatprep.subr.mxu0 0.0
    %84 = vmatpush1.msra.mxu0 %v64
    %85 = vmatprep.subr.mxu0 0.0
    %86 = vmatpush1.msra.mxu0 %v65
    %87 = vmatprep.subr.mxu0 0.0
    %88 = vmatpush1.msra.mxu0 %v66
    %89 = vmatprep.subr.mxu0 0.0
    %90 = vmatpush1.msra.mxu0 %v67
    %91 = vmatprep.subr.mxu0 0.0
    %92 = vmatpush1.msra.mxu0 %v68
    %93 = vmatprep.subr.mxu0 0.0
    %94 = vmatpush1.msra.mxu0 %v69
    %95 = vmatprep.subr.mxu0 0.0
    %96 = vmatpush1.msra.mxu0 %v70
    %97 = vmatprep.subr.mxu0 0.0
    %98 = vmatpush1.msra.mxu0 %v71
    %99 = vmatprep.subr.mxu0 0.0
    %100 = vmatpush1.msra.mxu0 %v72
    %101 = vmatprep.subr.mxu0 0.0
    %102 = vmatpush1.msra.mxu0 %v73
    %103 = vmatprep.subr.mxu0 0.0
    %104 = vmatpush1.msra.mxu0 %v74
    %105 = vmatprep.subr.mxu0 0.0
    %106 = vmatpush1.msra.mxu0 %v75
    %107 = vmatprep.subr.mxu0 0.0
    %108 = vmatpush1.msra.mxu0 %v76
    %109 = vmatprep.subr.mxu0 0.0
    %110 = vmatpush1.msra.mxu0 0.0
    %111 = vmatprep.subr.mxu0 0.0
    %112 = vmatpush1.msra.mxu0 0.0
    %113 = vmatprep.subr.mxu0 0.0
    %114 = vmatpush1.msra.mxu0 0.0
    %115 = vmatprep.subr.mxu0 0.0
    %116 = vmatpush1.msra.mxu0 0.0
    %117 = vmatprep.subr.mxu0 0.0
    %118 = vmatpush1.msra.mxu0 0.0
    %119 = vmatprep.subr.mxu0 0.0
    %120 = vmatpush1.msra.mxu0 0.0
    %121 = vmatprep.subr.mxu0 0.0
    %122 = vmatpush1.msra.mxu0 0.0
    %123 = vmatprep.subr.mxu0 0.0
    %124 = vmatpush1.msra.mxu0 0.0
    %125 = vmatprep.subr.mxu0 0.0
    %126 = vmatpush1.msra.mxu0 0.0
    %127 = vmatprep.subr.mxu0 0.0
    %128 = vmatpush1.msra.mxu0 0.0
    %129 = vmatprep.subr.mxu0 0.0
    %130 = vmatpush1.msra.mxu0 0.0
    %131 = vmatprep.subr.mxu0 0.0
    %132 = vmatpush1.msra.mxu0 0.0
    %133 = vmatprep.subr.mxu0 0.0
    %134 = vmatpush1.msra.mxu0 0.0
    %135 = vmatprep.subr.mxu0 0.0
    %136 = vmatpush1.msra.mxu0 0.0
    %137 = vmatprep.subr.mxu0 0.0
    %138 = vmatpush1.msra.mxu0 0.0
    %139 = vmatprep.subr.mxu0 0.0
    %140 = vmatpush1.msra.mxu0 0.0
    %141 = vmatprep.mubr.f32.mxu0 0.0
    %142 = vmatmul.mubr.f32.gmra.mrb[0].mxu0 %v58
    %v143 = vpop.f32.mrb[0].mxu0
    %v144 = vadd.f32 0.0, %v143
    %v145 = vpop.f32.mrb[0].mxu0
    %146 = vdwg.mxu0
    %v147 = vmul.f32 %v58, %v58
    %148 = vmatprep.subr.mxu0 0.0
    %149 = vmatpush1.msra.mxu0 %v61
    %150 = vmatprep.subr.mxu0 0.0
    %151 = vmatpush1.msra.mxu0 %v62
    %152 = vmatprep.subr.mxu0 0.0
    %153 = vmatpush1.msra.mxu0 %v63
    %154 = vmatprep.subr.mxu0 0.0
    %155 = vmatpush1.msra.mxu0 %v64
    %156 = vmatprep.subr.mxu0 0.0
    %157 = vmatpush1.msra.mxu0 %v65
    %158 = vmatprep.subr.mxu0 0.0
    %159 = vmatpush1.msra.mxu0 %v66
    %160 = vmatprep.subr.mxu0 0.0
    %161 = vmatpush1.msra.mxu0 %v67
    %162 = vmatprep.subr.mxu0 0.0
    %163 = vmatpush1.msra.mxu0 %v68
    %164 = vmatprep.subr.mxu0 0.0
    %165 = vmatpush1.msra.mxu0 %v69
    %166 = vmatprep.subr.mxu0 0.0
    %167 = vmatpush1.msra.mxu0 %v70
    %168 = vmatprep.subr.mxu0 0.0
    %169 = vmatpush1.msra.mxu0 %v71
    %170 = vmatprep.subr.mxu0 0.0
    %171 = vmatpush1.msra.mxu0 %v72
    %172 = vmatprep.subr.mxu0 0.0
    %173 = vmatpush1.msra.mxu0 %v73
    %174 = vmatprep.subr.mxu0 0.0
    %175 = vmatpush1.msra.mxu0 %v74
    %176 = vmatprep.subr.mxu0 0.0
    %177 = vmatpush1.msra.mxu0 %v75
    %178 = vmatprep.subr.mxu0 0.0
    %179 = vmatpush1.msra.mxu0 %v76
    %180 = vmatprep.subr.mxu0 0.0
    %181 = vmatpush1.msra.mxu0 0.0
    %182 = vmatprep.subr.mxu0 0.0
    %183 = vmatpush1.msra.mxu0 0.0
    %184 = vmatprep.subr.mxu0 0.0
    %185 = vmatpush1.msra.mxu0 0.0
    %186 = vmatprep.subr.mxu0 0.0
    %187 = vmatpush1.msra.mxu0 0.0
    %188 = vmatprep.subr.mxu0 0.0
    %189 = vmatpush1.msra.mxu0 0.0
    %190 = vmatprep.subr.mxu0 0.0
    %191 = vmatpush1.msra.mxu0 0.0
    %192 = vmatprep.subr.mxu0 0.0
    %193 = vmatpush1.msra.mxu0 0.0
    %194 = vmatprep.subr.mxu0 0.0
    %195 = vmatpush1.msra.mxu0 0.0
    %196 = vmatprep.subr.mxu0 0.0
    %197 = vmatpush1.msra.mxu0 0.0
    %198 = vmatprep.subr.mxu0 0.0
    %199 = vmatpush1.msra.mxu0 0.0
    %200 = vmatprep.subr.mxu0 0.0
    %201 = vmatpush1.msra.mxu0 0.0
    %202 = vmatprep.subr.mxu0 0.0
    %203 = vmatpush1.msra.mxu0 0.0
    %204 = vmatprep.subr.mxu0 0.0
    %205 = vmatpush1.msra.mxu0 0.0
    %206 = vmatprep.subr.mxu0 0.0
    %207 = vmatpush1.msra.mxu0 0.0
    %208 = vmatprep.subr.mxu0 0.0
    %209 = vmatpush1.msra.mxu0 0.0
    %210 = vmatprep.subr.mxu0 0.0
    %211 = vmatpush1.msra.mxu0 0.0
    %212 = vmatprep.mubr.f32.mxu0 0.0
    %213 = vmatmul.mubr.f32.gmra.mrb[0].mxu0 %v147
    %v214 = vpop.f32.mrb[0].mxu0
    %v215 = vadd.f32 0.0, %v214
    %v216 = vpop.f32.mrb[0].mxu0
    %217 = vdwg.mxu0
    %v218 = vmul.f32 %v144, 0.03125
    %v219 = vmul.f32 %v218, %v144
    %v220 = vsub.f32 %v215, %v219
    %v221 = vmul.f32 %v220, 0.032258064
    %v222 = vmax.f32 %v221, 0.0
    %v223 = vrsqrt.pop %v222
    %v224 = vmul.f32 %v222, %v223
    %vm225 = vcmp.eq.f32.partialorder %v222, inf
    %v226 = vsel %vm225, %v222, %v224
    %vm227 = vcmp.eq.f32.partialorder %v222, 0.0
    %v228 = vand.u32 %v222, 2147483648
    %v229 = vsel %vm227, %v228, %v226
    %v230 = vadd.f32 %v229, 1e-06
    %v231 = vrcp.pop %v230
    %v232 = vmul.f32 1.0, %v231
    %v233 = vsub.f32 %v58, %v218
    %v234 = vmul.f32 %v233, %v232
    %v236 = vlaneseq
    %v237 = vshrl.u32 %v236, 7
    %v238 = vsub.s32 0, %v237
    %v239 = vrot.slane %v59, %v238
    %v241 = vmul.f32 %v234, %v239
    %v243 = vlaneseq
    %v244 = vshrl.u32 %v243, 7
    %v245 = vsub.s32 0, %v244
    %v246 = vrot.slane %v60, %v245
    %v248 = vadd.f32 %v241, %v246
    %v249 = vld [vmem:[#allocation2] sm:$0xf]
    %v250 = vadd.f32 %v249, %v248
    %251 = vst [vmem:[#allocation8] sm:$0xf] %v250
    // Predicated region
    $region34: #{tpu_custom_call.1} parent=1 // pred_check
      _
    $region35: #{tpu_custom_call.1} parent=1 // pred_check_branch
      %253 = sbr.rel (0) target = $region37
    $region36: #{tpu_custom_call.1} parent=1 // pred_region
      %s255 = ssub.s32 64, 64
      %256 = vsyncadd [#allocation4], %s255
      %s258 = sshll.u32 [#allocation8], 4
      %s259 = int_to_ptr.vmem [resolvable:$true] %s258
      %261 = dma.vmem_to_hbm [thread:$0]  %s259, 64, %s5, [#allocation4]
    $region37: #{tpu_custom_call.1} parent=1 // pred_fallthru
      _
    // Predicated region
    $region38: #{tpu_custom_call.1} parent=1 // pred_check
      _
    $region39: #{tpu_custom_call.1} parent=1 // pred_check_branch
      %263 = sbr.rel (0) target = $region41
    $region40: #{tpu_custom_call.1} parent=1 // pred_region
      %264 = dma.done [#allocation4], 64
    $region41: #{tpu_custom_call.1} parent=1 // pred_fallthru
      _
    %265 = vsyncpa [#allocation3], 1
    %266 = vsyncpa [#allocation6], 1
    %267 = vsyncpa [#allocation4], 1

</llo_original>
